<compile_context>
chip_gen: v7x
topology: tpu7x:2x2x1
jax: 0.10.0
libtpu: 0.0.40
codegen_flags: <defaults>
</compile_context>

<pallas_src>
import jax
import jax.numpy as jnp
from jax.experimental import pallas as pl
from jax.experimental.pallas import tpu as pltpu


def _round_up(x, m):
    return (x + m - 1) // m * m


# ---------------------------------------------------------------------------
# Path A: IN == 1 and OUT == 1  (the literal nn.Linear(1, 1) of the module).
# Pure VPU: y = x * w + b. Weight and bias travel as one (2,) SMEM buffer.
# ---------------------------------------------------------------------------
def _scale_shift_kernel(wb_ref, x_ref, o_ref):
    # wb_ref: (2,) f32 SMEM -> [weight, bias]; x_ref / o_ref: same-shape VMEM.
    o_ref[...] = x_ref[...] * wb_ref[0] + wb_ref[1]


def _scale_shift(x, weight, bias):
    B = x.shape[0]
    wb = jnp.concatenate(
        [weight.reshape(-1), bias.reshape(-1)]).astype(jnp.float32)  # (2,)

    if B >= 128:
        # Lane-dense plumbing: (B, 1) output forces masked partial stores and
        # 1/128 lane utilization; reshape to (rows, 128) wrapper-side instead.
        n = B
        npad = _round_up(n, 8 * 128)
        x2 = jnp.pad(x.reshape(-1), (0, npad - n)).reshape(npad // 128, 128)
        y2 = pl.pallas_call(
            _scale_shift_kernel,
            out_shape=jax.ShapeDtypeStruct(x2.shape, jnp.float32),
            in_specs=[
                pl.BlockSpec(memory_space=pltpu.MemorySpace.SMEM),
                pl.BlockSpec(memory_space=pltpu.MemorySpace.VMEM),
            ],
            out_specs=pl.BlockSpec(memory_space=pltpu.MemorySpace.VMEM),
        )(wb, x2)
        return y2.reshape(-1)[:n].reshape(B, 1)

    # Tiny-batch case (the literal module: B == 1): one full-array VMEM block
    # for x, one SMEM scalar pair, a single VPU mul+add. No MXU, no grid.
    return pl.pallas_call(
        _scale_shift_kernel,
        out_shape=jax.ShapeDtypeStruct((B, 1), jnp.float32),
        in_specs=[
            pl.BlockSpec(memory_space=pltpu.MemorySpace.SMEM),
            pl.BlockSpec(memory_space=pltpu.MemorySpace.VMEM),
        ],
        out_specs=pl.BlockSpec(memory_space=pltpu.MemorySpace.VMEM),
    )(wb, x)


# ---------------------------------------------------------------------------
# Path B: OUT == 1, IN > 1. Keep weight lane-dense as (1, IN); VPU broadcast
# multiply + XLU lane-reduce instead of an N=1 MXU matmul. Bias via SMEM.
# ---------------------------------------------------------------------------
def _rowdot_kernel(b_ref, x_ref, w_ref, o_ref):
    # b_ref: (1,) SMEM, x_ref: (B, IN) VMEM, w_ref: (1, IN) VMEM, o_ref: (B, 1).
    prod = x_ref[...] * w_ref[...]                          # VPU
    o_ref[...] = jnp.sum(prod, axis=-1, keepdims=True) + b_ref[0]  # XLU reduce


def _rowdot_linear(x, weight, bias):
    B, IN = x.shape
    # TODO(synk): tile B with a grid axis if (B, IN) outgrows a single VMEM block.
    return pl.pallas_call(
        _rowdot_kernel,
        out_shape=jax.ShapeDtypeStruct((B, 1), jnp.float32),
        in_specs=[
            pl.BlockSpec(memory_space=pltpu.MemorySpace.SMEM),
            pl.BlockSpec(memory_space=pltpu.MemorySpace.VMEM),
            pl.BlockSpec(memory_space=pltpu.MemorySpace.VMEM),
        ],
        out_specs=pl.BlockSpec(memory_space=pltpu.MemorySpace.VMEM),
    )(bias.astype(jnp.float32), x, weight)


# ---------------------------------------------------------------------------
# Path C: OUT > 1. Tiled K-reduction matmul with f32 VMEM accumulator.
# Weight kept in torch (OUT, IN) layout; transpose folded into dot_general.
# ---------------------------------------------------------------------------
def _matmul_kernel(x_ref, w_ref, b_ref, o_ref, acc_ref):
    # x_ref: (tm, tk), w_ref: (tn, tk), b_ref: (1, tn), o_ref: (tm, tn).
    k = pl.program_id(2)

    @pl.when(k == 0)
    def _():
        acc_ref[...] = jnp.zeros_like(acc_ref)

    acc_ref[...] += jax.lax.dot_general(
        x_ref[...], w_ref[...],
        dimension_numbers=(((1,), (1,)), ((), ())),   # x @ w.T on the MXU
        preferred_element_type=jnp.float32)

    @pl.when(k == pl.num_programs(2) - 1)
    def _():
        o_ref[...] = (acc_ref[...] + b_ref[...]).astype(o_ref.dtype)


def _pick_tiles():
    # v5e MXU is 4x128x128 (256-wide N tiles give no benefit, double VMEM);
    # v6e/v7x MXUs are 2x256x256, so use tn=256 there.
    try:
        kind = jax.devices()[0].device_kind.lower()
    except Exception:
        kind = ""
    if "v5 lite" in kind or "v5e" in kind or "v5lite" in kind:
        return 128, 128, 256
    return 128, 256, 512   # well under the ~32 MiB scoped-VMEM budget on v7x


def _tiled_linear(x, weight, bias):
    B, IN = x.shape
    OUT = weight.shape[0]
    tm, tn, tk = _pick_tiles()
    Bp, Np, Kp = _round_up(B, tm), _round_up(OUT, tn), _round_up(IN, tk)

    xp = jnp.pad(x, ((0, Bp - B), (0, Kp - IN)))
    wp = jnp.pad(weight, ((0, Np - OUT), (0, Kp - IN)))
    bp = jnp.pad(bias, (0, Np - OUT)).reshape(1, Np).astype(jnp.float32)

    out = pl.pallas_call(
        _matmul_kernel,
        out_shape=jax.ShapeDtypeStruct((Bp, Np), jnp.float32),
        grid_spec=pltpu.PrefetchScalarGridSpec(
            num_scalar_prefetch=0,
            grid=(Bp // tm, Np // tn, Kp // tk),
            in_specs=[
                pl.BlockSpec((tm, tk), lambda i, j, k: (i, k)),
                pl.BlockSpec((tn, tk), lambda i, j, k: (j, k)),
                pl.BlockSpec((1, tn), lambda i, j, k: (0, j)),
            ],
            out_specs=pl.BlockSpec((tm, tn), lambda i, j, k: (i, j)),
            scratch_shapes=[pltpu.VMEM((tm, tn), jnp.float32)],
        ),
        compiler_params=pltpu.CompilerParams(
            dimension_semantics=("parallel", "parallel", "arbitrary")),
    )(xp, wp, bp)
    return out[:B, :OUT]


# ---------------------------------------------------------------------------
# Dispatcher (torch.nn.Linear semantics).
# ---------------------------------------------------------------------------
def linear_forward(x, weight, bias):
    """y = x @ weight^T + bias.

    x: (B, IN) f32, weight: (OUT, IN) f32, bias: (OUT,) f32 -> (B, OUT) f32.
    """
    B, IN = x.shape
    OUT, IN_w = weight.shape
    assert IN == IN_w, (IN, IN_w)

    if OUT == 1 and IN == 1:
        return _scale_shift(x, weight, bias)
    if OUT == 1:
        return _rowdot_linear(x, weight, bias)
    return _tiled_linear(x, weight, bias)


if __name__ == "__main__":
    key = jax.random.PRNGKey(0)
    kw, kb = jax.random.split(key)

    # nn.Linear(1, 1): weight (1, 1), bias (1,). Deterministic synthetic init
    # mimicking PyTorch's uniform(-1/sqrt(fan_in), 1/sqrt(fan_in)), fan_in=1.
    weight = jax.random.uniform(kw, (1, 1), jnp.float32, minval=-1.0, maxval=1.0)
    bias = jax.random.uniform(kb, (1,), jnp.float32, minval=-1.0, maxval=1.0)

    # hour_var = tensor([[4.0]])
    x = jnp.array([[4.0]], dtype=jnp.float32)

    y_pred = linear_forward(x, weight, bias)
    y_pred = jax.block_until_ready(y_pred)

    # Reference check against plain JAX.
    y_ref = x @ weight.T + bias
    assert y_pred.shape == (1, 1)
    assert jnp.allclose(y_pred, y_ref, atol=1e-6), (y_pred, y_ref)

    print("KERNEL_OK")
</pallas_src>

<mosaic_0001>
module attributes {stable_mosaic.version = 11 : i64} {
  func.func @_scale_shift_kernel(%arg0: memref<2xf32, #tpu.memory_space<smem>>, %arg1: memref<1x1xf32, #tpu.memory_space<vmem>>, %arg2: memref<1x1xf32, #tpu.memory_space<vmem>>) attributes {dimension_semantics = [], scalar_prefetch = 0 : i64, scratch_operands = 0 : i64, tpu.core_type = #tpu.core_type<tc>} {
    %c0 = arith.constant 0 : index
    %c0_0 = arith.constant 0 : index
    %0 = vector.load %arg1[%c0, %c0_0] : memref<1x1xf32, #tpu.memory_space<vmem>>, vector<1x1xf32>
    %c0_1 = arith.constant 0 : index
    %1 = memref.load %arg0[%c0_1] : memref<2xf32, #tpu.memory_space<smem>>
    %2 = vector.broadcast %1 : f32 to vector<1x1xf32>
    %3 = arith.mulf %0, %2 : vector<1x1xf32>
    %c1 = arith.constant 1 : index
    %4 = memref.load %arg0[%c1] : memref<2xf32, #tpu.memory_space<smem>>
    %5 = vector.broadcast %4 : f32 to vector<1x1xf32>
    %6 = arith.addf %3, %5 : vector<1x1xf32>
    %c0_2 = arith.constant 0 : index
    %c0_3 = arith.constant 0 : index
    %7 = vector.load %arg2[%c0_2, %c0_3] : memref<1x1xf32, #tpu.memory_space<vmem>>, vector<1x1xf32>
    tpu.vector_store %arg2[%c0_2, %c0_3], %6 {strides = array<i32>} : memref<1x1xf32, #tpu.memory_space<vmem>>, vector<1x1xf32>,
    return
  }
}

</mosaic_0001>

<llo_original>
// kernel: tpu_custom_call.1
$region0: #{tpu_custom_call.1}
  #allocation0 [shape = 'u32[]', space=smem, size = 0x4, offset = 0x4, fixed_abs, tag = 'smem constant byte address 0x4 - core index']
  #allocation1 [shape = 'u32[144,128]{1,0:T(1,128)}', space=vmem, size = 0x12000, scoped, tag = 'internal scratch']
  #allocation2 [shape = 'f32[1,1]{1,0:T(1,128)S(1)}', space=vmem, size = 0x200, scoped, tag = 'scoped memory for tpu_custom_call.1']
  %s0 = inlined_call_operand.vmem [shape: f32[2], index: 0, kind: input, shape index: {}]
  %s1 = inlined_call_operand.<no memory space> [shape: f32[1,1], index: 1, kind: input, shape index: {}]
  %s2 = inlined_call_operand.hbm [shape: f32[1,1], index: 2, kind: output, shape index: {}]
  %s3 = sld [smem:[#allocation0]]
  $region22: #{tpu_custom_call.1} parent=0
    _
  %s5 = ssub.s32 1, %s3
  %s6 = scalar_select 0, %s5, %s3
  %v7 = vstv %s1
  %8 = vst [vmem:[#allocation2] sm:$0x1] %v7
  $region1: #{tpu_custom_call.1} parent=0
    #allocation3 [shape = 'u8[512]{0}', space=smem, size = 0x200, scoped, tag = 'input window, operand 0, single buffered']
    #allocation4 [shape = 's32[1]{0}', space=sflag, size = 0x4, scoped, tag = 'scoped memory for tpu_custom_call.1']
    #allocation5 [shape = 's32[1]{0}', space=sflag, size = 0x4, scoped, tag = 'scoped memory for tpu_custom_call.1']
    #allocation6 [shape = 'u8[512]{0}', space=vmem, size = 0x400, scoped, tag = 'output window, operand 0, single buffered']
    %9 = vsyncpa [#allocation5], 0
    %10 = vsyncpa [#allocation4], 0
    // Predicated region
    $region2: #{tpu_custom_call.1} parent=1 // pred_check
      _
    $region3: #{tpu_custom_call.1} parent=1 // pred_check_branch
      %12 = sbr.rel (0) target = $region5
    $region4: #{tpu_custom_call.1} parent=1 // pred_region
      %s14 = ssub.s32 16, 16
      %15 = vsyncadd [#allocation5], %s14
      %s17 = sshll.u32 %s0, 4
      %s18 = int_to_ptr.vmem [resolvable:$true] %s17
      %20 = dma.vmem_to_smem %s18, 16, [#allocation3], [#allocation5]
    $region5: #{tpu_custom_call.1} parent=1 // pred_fallthru
      _
    // Predicated region
    $region6: #{tpu_custom_call.1} parent=1 // pred_check
      _
    $region7: #{tpu_custom_call.1} parent=1 // pred_check_branch
      %22 = sbr.rel (0) target = $region9
    $region8: #{tpu_custom_call.1} parent=1 // pred_region
      _
    $region9: #{tpu_custom_call.1} parent=1 // pred_fallthru
      _
    // Predicated region
    $region10: #{tpu_custom_call.1} parent=1 // pred_check
      _
    $region11: #{tpu_custom_call.1} parent=1 // pred_check_branch
      %24 = sbr.rel (0) target = $region13
    $region12: #{tpu_custom_call.1} parent=1 // pred_region
      %25 = dma.done [#allocation5], 16
    $region13: #{tpu_custom_call.1} parent=1 // pred_fallthru
      _
    %26 = sfence
    %v27 = vld [vmem:[#allocation2] sm:$0x1]
    %s28 = sld [smem:[#allocation3]]
    %v29 = vstv %s28
    %v30 = vmul.f32 %v27, %v29
    %s31 = sld [smem:[#allocation3 + $0x1]]
    %v32 = vstv %s31
    %v33 = vadd.f32 %v30, %v32
    %vm34 = vcmask 0
    %35 = vst.msk [vmem:[#allocation6] sm:$0x1] %vm34, %v33
    // Predicated region
    $region14: #{tpu_custom_call.1} parent=1 // pred_check
      _
    $region15: #{tpu_custom_call.1} parent=1 // pred_check_branch
      %37 = sbr.rel (0) target = $region17
    $region16: #{tpu_custom_call.1} parent=1 // pred_region
      %s39 = ssub.s32 16, 16
      %40 = vsyncadd [#allocation4], %s39
      %s42 = sshll.u32 [#allocation6], 4
      %s43 = int_to_ptr.vmem [resolvable:$true] %s42
      %45 = dma.vmem_to_hbm [thread:$0]  %s43, 16, %s2, [#allocation4]
    $region17: #{tpu_custom_call.1} parent=1 // pred_fallthru
      _
    // Predicated region
    $region18: #{tpu_custom_call.1} parent=1 // pred_check
      _
    $region19: #{tpu_custom_call.1} parent=1 // pred_check_branch
      %47 = sbr.rel (0) target = $region21
    $region20: #{tpu_custom_call.1} parent=1 // pred_region
      %48 = dma.done [#allocation4], 16
    $region21: #{tpu_custom_call.1} parent=1 // pred_fallthru
      _
    %49 = vsyncpa [#allocation4], 1
    %50 = vsyncpa [#allocation5], 1

</llo_original>
